<compile_context>
chip_gen: v6e
topology: v6e:2x2x1
jax: 0.10.0
libtpu: 0.0.40
codegen_flags: <defaults>
</compile_context>

<pallas_src>
import functools

import jax
import jax.numpy as jnp
import numpy as np
from jax.experimental import pallas as pl
from jax.experimental.pallas import tpu as pltpu


_HEAD_PAD = 128  # padded lane width of the fused stream-2 output / q block


def _silu(z):
    # SiLU(z) = z * sigmoid(z). exp and approx reciprocal both go to the EUP
    # slot; mul/add to the VPU -- no exact f32 divide sequence on the VALU.
    return z * pl.reciprocal(1.0 + jnp.exp(-z), approx=True)


def dueling_dqn_kernel(
    state_ref,            # (B, S)        f32
    onehot_ref,           # (B, T)        f32
    w1s_ref,              # (S, 256)      bf16   (rows 0..S-1 of fc1 weight)
    w1t_ref,              # (T, 256)      bf16   (rows S.. of fc1 weight)
    b1_ref,               # (1, 256)      f32
    w2_ref, b2_ref,       # (256, 256) bf16, (1, 256) f32
    w3_ref, b3_ref,       # (256, 128) bf16, (1, 128) f32
    wva1_ref, bva1_ref,   # (128, 128) bf16, (1, 128) f32   [wv1 | wa1]
    wva2_ref, bva2_ref,   # (128, 128) bf16, (1, 128) f32   block-diag, padded
    q_ref,                # (B, 128)      f32   (q in lanes 0..A-1)
    *, action_size,
):
    f32, bf16 = jnp.float32, jnp.bfloat16

    s = state_ref[...].astype(bf16)
    t = onehot_ref[...].astype(bf16)

    # fc1: x @ W1 with x = [state | onehot] done as a split sum (no concat op).
    z1 = (jnp.dot(s, w1s_ref[...], preferred_element_type=f32)
          + jnp.dot(t, w1t_ref[...], preferred_element_type=f32)
          + b1_ref[...])
    h1 = _silu(z1)

    h2 = _silu(jnp.dot(h1.astype(bf16), w2_ref[...],
                       preferred_element_type=f32) + b2_ref[...])
    h3 = _silu(jnp.dot(h2.astype(bf16), w3_ref[...],
                       preferred_element_type=f32) + b3_ref[...])

    # Fused stream-1 layers: hva = [vh | ah] in a single 128-wide matmul.
    hva = _silu(jnp.dot(h3.astype(bf16), wva1_ref[...],
                        preferred_element_type=f32) + bva1_ref[...])

    # Fused block-diagonal stream-2 layers:
    #   out2[:, :A]   = advantage(ah)      (driven by rows 64..127 of wva2)
    #   out2[:, A:A+1] = value(vh)         (driven by rows 0..63  of wva2)
    out2 = jnp.dot(hva.astype(bf16), wva2_ref[...],
                   preferred_element_type=f32) + bva2_ref[...]

    A = action_size
    adv = out2[:, :A]                                      # (B, A) real lanes
    value = out2[:, A:A + 1]                               # (B, 1)
    adv_mean = jnp.sum(adv, axis=1, keepdims=True) * (1.0 / A)

    # Lane-dense unmasked 128-wide store: lanes 0..A-1 hold
    # value + adv - adv_mean; the remaining lanes hold junk the wrapper drops.
    q_ref[...] = out2 + (value - adv_mean)


def init_params(key, state_size, action_size, target_count):
    """Deterministic init (weights as (in, out); biases as (1, out))."""
    input_size = state_size + target_count
    dims = {
        "1": (input_size, 256),
        "2": (256, 256),
        "3": (256, 128),
        "v1": (128, 64),
        "v2": (64, 1),
        "a1": (128, 64),
        "a2": (64, action_size),
    }
    params = {}
    keys = jax.random.split(key, len(dims))
    for k, (name, (fin, fout)) in zip(keys, dims.items()):
        scale = 1.0 / np.sqrt(fin)
        params["w" + name] = (
            jax.random.normal(k, (fin, fout), jnp.float32) * scale)
        params["b" + name] = jnp.zeros((1, fout), jnp.float32) + 0.01
    return params


def prepare_fused_params(params, state_size, action_size):
    """One-time (offline) fusion of torch-layout params into kernel operands."""
    assert action_size + 1 <= _HEAD_PAD
    bf16 = jnp.bfloat16
    S, A = state_size, action_size

    w1 = params["w1"]

    # Block-diagonal, column-padded fusion of the two stream-2 heads.
    wva2 = jnp.zeros((128, _HEAD_PAD), jnp.float32)
    wva2 = wva2.at[64:, :A].set(params["wa2"])         # advantage head (from ah)
    wva2 = wva2.at[:64, A].set(params["wv2"][:, 0])    # value head (from vh)
    bva2 = jnp.zeros((1, _HEAD_PAD), jnp.float32)
    bva2 = bva2.at[0, :A].set(params["ba2"][0])
    bva2 = bva2.at[0, A].set(params["bv2"][0, 0])

    return {
        "w1s": w1[:S].astype(bf16),
        "w1t": w1[S:].astype(bf16),
        "b1": params["b1"],
        "w2": params["w2"].astype(bf16),
        "b2": params["b2"],
        "w3": params["w3"].astype(bf16),
        "b3": params["b3"],
        "wva1": jnp.concatenate(
            [params["wv1"], params["wa1"]], axis=1).astype(bf16),   # (128,128)
        "bva1": jnp.concatenate(
            [params["bv1"], params["ba1"]], axis=1),                # (1,128)
        "wva2": wva2.astype(bf16),
        "bva2": bva2,
    }


@functools.partial(jax.jit, static_argnames=("action_size",))
def dueling_dqn_forward(state, target_onehot, fused, *, action_size):
    B = state.shape[0]
    operands = (
        state, target_onehot,
        fused["w1s"], fused["w1t"], fused["b1"],
        fused["w2"], fused["b2"],
        fused["w3"], fused["b3"],
        fused["wva1"], fused["bva1"],
        fused["wva2"], fused["bva2"],
    )
    vmem = pltpu.MemorySpace.VMEM
    # No grid: the whole (tiny) problem is one kernel invocation; everything
    # lives in VMEM. If B grows past the latency-bound regime, add a parallel
    # batch grid axis here (grid=(B//TB,), dimension_semantics=("parallel",))
    # so v7x's second TensorCore is used.
    q_pad = pl.pallas_call(
        functools.partial(dueling_dqn_kernel, action_size=action_size),
        out_shape=jax.ShapeDtypeStruct((B, _HEAD_PAD), jnp.float32),
        in_specs=[pl.BlockSpec(memory_space=vmem)] * len(operands),
        out_specs=pl.BlockSpec(memory_space=vmem),
    )(*operands)
    return q_pad[:, :action_size]


def reference_forward(state, target_onehot, params):
    """Pure f32 JAX reference mirroring the PyTorch module."""
    x = jnp.concatenate([state, target_onehot], axis=1)

    def silu(z):
        return z * jax.nn.sigmoid(z)

    h1 = silu(x @ params["w1"] + params["b1"])
    h2 = silu(h1 @ params["w2"] + params["b2"])
    h3 = silu(h2 @ params["w3"] + params["b3"])
    vh = silu(h3 @ params["wv1"] + params["bv1"])
    value = vh @ params["wv2"] + params["bv2"]
    ah = silu(h3 @ params["wa1"] + params["ba1"])
    adv = ah @ params["wa2"] + params["ba2"]
    return value + adv - adv.mean(axis=1, keepdims=True)


if __name__ == "__main__":
    # Small shapes consistent with the module's forward.
    batch = 8
    state_size = 24
    target_count = 8
    action_size = 6

    key = jax.random.PRNGKey(0)
    k_params, k_state, k_tgt = jax.random.split(key, 3)

    params = init_params(k_params, state_size, action_size, target_count)
    fused = prepare_fused_params(params, state_size, action_size)

    state = jax.random.normal(k_state, (batch, state_size), jnp.float32)
    tgt_ids = jax.random.randint(k_tgt, (batch,), 0, target_count)
    target_onehot = jax.nn.one_hot(tgt_ids, target_count, dtype=jnp.float32)

    q = dueling_dqn_forward(state, target_onehot, fused,
                            action_size=action_size)
    q = jax.block_until_ready(q)

    q_ref = reference_forward(state, target_onehot, params)
    # Tolerance loosened vs. the f32 reference because of bf16 matmul operands
    # and the approx EUP reciprocal in SiLU.
    np.testing.assert_allclose(np.asarray(q), np.asarray(q_ref),
                               rtol=5e-2, atol=5e-2)

    print("KERNEL_OK")
</pallas_src>

<mosaic_0001>
module attributes {stable_mosaic.version = 11 : i64} {
  func.func @dueling_dqn_kernel(%arg0: memref<8x24xf32, #tpu.memory_space<vmem>>, %arg1: memref<8x8xf32, #tpu.memory_space<vmem>>, %arg2: memref<24x256xbf16, #tpu.memory_space<vmem>>, %arg3: memref<8x256xbf16, #tpu.memory_space<vmem>>, %arg4: memref<1x256xf32, #tpu.memory_space<vmem>>, %arg5: memref<256x256xbf16, #tpu.memory_space<vmem>>, %arg6: memref<1x256xf32, #tpu.memory_space<vmem>>, %arg7: memref<256x128xbf16, #tpu.memory_space<vmem>>, %arg8: memref<1x128xf32, #tpu.memory_space<vmem>>, %arg9: memref<128x128xbf16, #tpu.memory_space<vmem>>, %arg10: memref<1x128xf32, #tpu.memory_space<vmem>>, %arg11: memref<128x128xbf16, #tpu.memory_space<vmem>>, %arg12: memref<1x128xf32, #tpu.memory_space<vmem>>, %arg13: memref<8x128xf32, #tpu.memory_space<vmem>>) attributes {dimension_semantics = [], scalar_prefetch = 0 : i64, scratch_operands = 0 : i64, tpu.core_type = #tpu.core_type<tc>} {
    %c0 = arith.constant 0 : index
    %c0_0 = arith.constant 0 : index
    %0 = vector.load %arg0[%c0, %c0_0] : memref<8x24xf32, #tpu.memory_space<vmem>>, vector<8x24xf32>
    %1 = arith.truncf %0 : vector<8x24xf32> to vector<8x24xbf16>
    %c0_1 = arith.constant 0 : index
    %c0_2 = arith.constant 0 : index
    %2 = vector.load %arg1[%c0_1, %c0_2] : memref<8x8xf32, #tpu.memory_space<vmem>>, vector<8x8xf32>
    %3 = arith.truncf %2 : vector<8x8xf32> to vector<8x8xbf16>
    %c0_3 = arith.constant 0 : index
    %c0_4 = arith.constant 0 : index
    %4 = vector.load %arg2[%c0_3, %c0_4] : memref<24x256xbf16, #tpu.memory_space<vmem>>, vector<24x256xbf16>
    %cst = arith.constant dense<0.000000e+00> : vector<8x256xf32>
    %5 = tpu.matmul %1, %4, %cst {dimension_numbers = #tpu.dot_dimension_numbers<[1], [0], [0], [1], [0, 0, 1, 1], [], []>} : vector<8x24xbf16>, vector<24x256xbf16>, vector<8x256xf32> -> vector<8x256xf32>
    %c0_5 = arith.constant 0 : index
    %c0_6 = arith.constant 0 : index
    %6 = vector.load %arg3[%c0_5, %c0_6] : memref<8x256xbf16, #tpu.memory_space<vmem>>, vector<8x256xbf16>
    %cst_7 = arith.constant dense<0.000000e+00> : vector<8x256xf32>
    %7 = tpu.matmul %3, %6, %cst_7 {dimension_numbers = #tpu.dot_dimension_numbers<[1], [0], [0], [1], [0, 0, 1, 1], [], []>} : vector<8x8xbf16>, vector<8x256xbf16>, vector<8x256xf32> -> vector<8x256xf32>
    %8 = arith.addf %5, %7 : vector<8x256xf32>
    %c0_8 = arith.constant 0 : index
    %c0_9 = arith.constant 0 : index
    %9 = vector.load %arg4[%c0_8, %c0_9] : memref<1x256xf32, #tpu.memory_space<vmem>>, vector<1x256xf32>
    %10 = vector.broadcast %9 : vector<1x256xf32> to vector<8x256xf32>
    %11 = arith.addf %8, %10 : vector<8x256xf32>
    %cst_10 = arith.constant 0.000000e+00 : f32
    %12 = vector.broadcast %cst_10 : f32 to vector<8x256xf32>
    %13 = arith.subf %12, %11 : vector<8x256xf32>
    %14 = math.exp %13 : vector<8x256xf32>
    %cst_11 = arith.constant 1.000000e+00 : f32
    %15 = vector.broadcast %cst_11 : f32 to vector<8x256xf32>
    %16 = arith.addf %15, %14 : vector<8x256xf32>
    %17 = tpu.reciprocal %16 {approx = true} : vector<8x256xf32> -> vector<8x256xf32>
    %18 = arith.mulf %11, %17 : vector<8x256xf32>
    %19 = arith.truncf %18 : vector<8x256xf32> to vector<8x256xbf16>
    %c0_12 = arith.constant 0 : index
    %c0_13 = arith.constant 0 : index
    %20 = vector.load %arg5[%c0_12, %c0_13] : memref<256x256xbf16, #tpu.memory_space<vmem>>, vector<256x256xbf16>
    %cst_14 = arith.constant dense<0.000000e+00> : vector<8x256xf32>
    %21 = tpu.matmul %19, %20, %cst_14 {dimension_numbers = #tpu.dot_dimension_numbers<[1], [0], [0], [1], [0, 0, 1, 1], [], []>} : vector<8x256xbf16>, vector<256x256xbf16>, vector<8x256xf32> -> vector<8x256xf32>
    %c0_15 = arith.constant 0 : index
    %c0_16 = arith.constant 0 : index
    %22 = vector.load %arg6[%c0_15, %c0_16] : memref<1x256xf32, #tpu.memory_space<vmem>>, vector<1x256xf32>
    %23 = vector.broadcast %22 : vector<1x256xf32> to vector<8x256xf32>
    %24 = arith.addf %21, %23 : vector<8x256xf32>
    %cst_17 = arith.constant 0.000000e+00 : f32
    %25 = vector.broadcast %cst_17 : f32 to vector<8x256xf32>
    %26 = arith.subf %25, %24 : vector<8x256xf32>
    %27 = math.exp %26 : vector<8x256xf32>
    %cst_18 = arith.constant 1.000000e+00 : f32
    %28 = vector.broadcast %cst_18 : f32 to vector<8x256xf32>
    %29 = arith.addf %28, %27 : vector<8x256xf32>
    %30 = tpu.reciprocal %29 {approx = true} : vector<8x256xf32> -> vector<8x256xf32>
    %31 = arith.mulf %24, %30 : vector<8x256xf32>
    %32 = arith.truncf %31 : vector<8x256xf32> to vector<8x256xbf16>
    %c0_19 = arith.constant 0 : index
    %c0_20 = arith.constant 0 : index
    %33 = vector.load %arg7[%c0_19, %c0_20] : memref<256x128xbf16, #tpu.memory_space<vmem>>, vector<256x128xbf16>
    %cst_21 = arith.constant dense<0.000000e+00> : vector<8x128xf32>
    %34 = tpu.matmul %32, %33, %cst_21 {dimension_numbers = #tpu.dot_dimension_numbers<[1], [0], [0], [1], [0, 0, 1, 1], [], []>} : vector<8x256xbf16>, vector<256x128xbf16>, vector<8x128xf32> -> vector<8x128xf32>
    %c0_22 = arith.constant 0 : index
    %c0_23 = arith.constant 0 : index
    %35 = vector.load %arg8[%c0_22, %c0_23] : memref<1x128xf32, #tpu.memory_space<vmem>>, vector<1x128xf32>
    %36 = vector.broadcast %35 : vector<1x128xf32> to vector<8x128xf32>
    %37 = arith.addf %34, %36 : vector<8x128xf32>
    %cst_24 = arith.constant 0.000000e+00 : f32
    %38 = vector.broadcast %cst_24 : f32 to vector<8x128xf32>
    %39 = arith.subf %38, %37 : vector<8x128xf32>
    %40 = math.exp %39 : vector<8x128xf32>
    %cst_25 = arith.constant 1.000000e+00 : f32
    %41 = vector.broadcast %cst_25 : f32 to vector<8x128xf32>
    %42 = arith.addf %41, %40 : vector<8x128xf32>
    %43 = tpu.reciprocal %42 {approx = true} : vector<8x128xf32> -> vector<8x128xf32>
    %44 = arith.mulf %37, %43 : vector<8x128xf32>
    %45 = arith.truncf %44 : vector<8x128xf32> to vector<8x128xbf16>
    %c0_26 = arith.constant 0 : index
    %c0_27 = arith.constant 0 : index
    %46 = vector.load %arg9[%c0_26, %c0_27] : memref<128x128xbf16, #tpu.memory_space<vmem>>, vector<128x128xbf16>
    %cst_28 = arith.constant dense<0.000000e+00> : vector<8x128xf32>
    %47 = tpu.matmul %45, %46, %cst_28 {dimension_numbers = #tpu.dot_dimension_numbers<[1], [0], [0], [1], [0, 0, 1, 1], [], []>} : vector<8x128xbf16>, vector<128x128xbf16>, vector<8x128xf32> -> vector<8x128xf32>
    %c0_29 = arith.constant 0 : index
    %c0_30 = arith.constant 0 : index
    %48 = vector.load %arg10[%c0_29, %c0_30] : memref<1x128xf32, #tpu.memory_space<vmem>>, vector<1x128xf32>
    %49 = vector.broadcast %48 : vector<1x128xf32> to vector<8x128xf32>
    %50 = arith.addf %47, %49 : vector<8x128xf32>
    %cst_31 = arith.constant 0.000000e+00 : f32
    %51 = vector.broadcast %cst_31 : f32 to vector<8x128xf32>
    %52 = arith.subf %51, %50 : vector<8x128xf32>
    %53 = math.exp %52 : vector<8x128xf32>
    %cst_32 = arith.constant 1.000000e+00 : f32
    %54 = vector.broadcast %cst_32 : f32 to vector<8x128xf32>
    %55 = arith.addf %54, %53 : vector<8x128xf32>
    %56 = tpu.reciprocal %55 {approx = true} : vector<8x128xf32> -> vector<8x128xf32>
    %57 = arith.mulf %50, %56 : vector<8x128xf32>
    %58 = arith.truncf %57 : vector<8x128xf32> to vector<8x128xbf16>
    %c0_33 = arith.constant 0 : index
    %c0_34 = arith.constant 0 : index
    %59 = vector.load %arg11[%c0_33, %c0_34] : memref<128x128xbf16, #tpu.memory_space<vmem>>, vector<128x128xbf16>
    %cst_35 = arith.constant dense<0.000000e+00> : vector<8x128xf32>
    %60 = tpu.matmul %58, %59, %cst_35 {dimension_numbers = #tpu.dot_dimension_numbers<[1], [0], [0], [1], [0, 0, 1, 1], [], []>} : vector<8x128xbf16>, vector<128x128xbf16>, vector<8x128xf32> -> vector<8x128xf32>
    %c0_36 = arith.constant 0 : index
    %c0_37 = arith.constant 0 : index
    %61 = vector.load %arg12[%c0_36, %c0_37] : memref<1x128xf32, #tpu.memory_space<vmem>>, vector<1x128xf32>
    %62 = vector.broadcast %61 : vector<1x128xf32> to vector<8x128xf32>
    %63 = arith.addf %60, %62 : vector<8x128xf32>
    %64 = vector.extract_strided_slice %63 {offsets = [0, 0], sizes = [8, 6], strides = [1, 1]} : vector<8x128xf32> to vector<8x6xf32>
    %65 = vector.extract_strided_slice %63 {offsets = [0, 6], sizes = [8, 1], strides = [1, 1]} : vector<8x128xf32> to vector<8x1xf32>
    %cst_38 = arith.constant dense<0.000000e+00> : vector<8xf32>
    %66 = vector.multi_reduction <add>, %64, %cst_38 [1] : vector<8x6xf32> to vector<8xf32>
    %67 = vector.shape_cast %66 : vector<8xf32> to vector<8x1xf32>
    %cst_39 = arith.constant 0.166666672 : f32
    %68 = vector.broadcast %cst_39 : f32 to vector<8x1xf32>
    %69 = arith.mulf %67, %68 : vector<8x1xf32>
    %70 = arith.subf %65, %69 : vector<8x1xf32>
    %71 = vector.broadcast %70 : vector<8x1xf32> to vector<8x128xf32>
    %72 = arith.addf %63, %71 : vector<8x128xf32>
    %c0_40 = arith.constant 0 : index
    %c0_41 = arith.constant 0 : index
    %73 = vector.load %arg13[%c0_40, %c0_41] : memref<8x128xf32, #tpu.memory_space<vmem>>, vector<8x128xf32>
    tpu.vector_store %arg13[%c0_40, %c0_41], %72 {strides = array<i32>} : memref<8x128xf32, #tpu.memory_space<vmem>>, vector<8x128xf32>,
    return
  }
}

</mosaic_0001>

<llo_original>
// kernel: dueling_dqn_forward.1
$region0: #{dueling_dqn_forward.1}
  #allocation0 [shape = 'u32[]', space=smem, size = 0x4, offset = 0x4, fixed_abs, tag = 'smem constant byte address 0x4 - core index']
  #allocation1 [shape = 'u32[144,128]{1,0:T(1,128)}', space=vmem, size = 0x12000, scoped, tag = 'internal scratch']
  %s0 = inlined_call_operand.hbm [shape: f32[8,24], index: 0, kind: input, shape index: {}]
  %s1 = inlined_call_operand.hbm [shape: f32[8,8], index: 1, kind: input, shape index: {}]
  %s2 = inlined_call_operand.hbm [shape: bf16[24,256], index: 2, kind: input, shape index: {}]
  %s3 = inlined_call_operand.vmem [shape: bf16[8,256], index: 3, kind: input, shape index: {}]
  %s4 = inlined_call_operand.vmem [shape: f32[1,256], index: 4, kind: input, shape index: {}]
  %s5 = inlined_call_operand.hbm [shape: bf16[256,256], index: 5, kind: input, shape index: {}]
  %s6 = inlined_call_operand.vmem [shape: f32[1,256], index: 6, kind: input, shape index: {}]
  %s7 = inlined_call_operand.hbm [shape: bf16[256,128], index: 7, kind: input, shape index: {}]
  %s8 = inlined_call_operand.vmem [shape: f32[1,128], index: 8, kind: input, shape index: {}]
  %s9 = inlined_call_operand.hbm [shape: bf16[128,128], index: 9, kind: input, shape index: {}]
  %s10 = inlined_call_operand.vmem [shape: f32[1,128], index: 10, kind: input, shape index: {}]
  %s11 = inlined_call_operand.hbm [shape: bf16[128,128], index: 11, kind: input, shape index: {}]
  %s12 = inlined_call_operand.hbm [shape: f32[1,128], index: 12, kind: input, shape index: {}]
  %s13 = inlined_call_operand.hbm [shape: f32[8,128], index: 13, kind: output, shape index: {}]
  %s14 = sld [smem:[#allocation0]]
  $region94: #{dueling_dqn_forward.1} parent=0
    _
  %s16 = ssub.s32 1, %s14
  %s17 = scalar_select 0, %s16, %s14
  $region1: #{dueling_dqn_forward.1} parent=0
    #allocation2 [shape = 'u8[4096]{0}', space=vmem, size = 0x1000, scoped, tag = 'input window, operand 0, single buffered']
    #allocation3 [shape = 's32[1]{0}', space=sflag, size = 0x4, scoped, tag = 'scoped memory for dueling_dqn_forward.1']
    #allocation4 [shape = 's32[1]{0}', space=sflag, size = 0x4, scoped, tag = 'scoped memory for dueling_dqn_forward.1']
    #allocation5 [shape = 'u8[4096]{0}', space=vmem, size = 0x1000, scoped, tag = 'input window, operand 1, single buffered']
    #allocation6 [shape = 's32[1]{0}', space=sflag, size = 0x4, scoped, tag = 'scoped memory for dueling_dqn_forward.1']
    #allocation7 [shape = 'u8[12288]{0}', space=vmem, size = 0x3000, scoped, tag = 'input window, operand 2, single buffered']
    #allocation8 [shape = 'u8[131072]{0}', space=vmem, size = 0x20000, scoped, tag = 'input window, operand 5, single buffered']
    #allocation9 [shape = 's32[1]{0}', space=sflag, size = 0x4, scoped, tag = 'scoped memory for dueling_dqn_forward.1']
    #allocation10 [shape = 'u8[65536]{0}', space=vmem, size = 0x10000, scoped, tag = 'input window, operand 7, single buffered']
    #allocation11 [shape = 'u8[32768]{0}', space=vmem, size = 0x8000, scoped, tag = 'input window, operand 9, single buffered']
    #allocation12 [shape = 's32[1]{0}', space=sflag, size = 0x4, scoped, tag = 'scoped memory for dueling_dqn_forward.1']
    #allocation13 [shape = 'u8[32768]{0}', space=vmem, size = 0x8000, scoped, tag = 'input window, operand 11, single buffered']
    #allocation14 [shape = 'u8[512]{0}', space=vmem, size = 0x400, scoped, tag = 'input window, operand 12, single buffered']
    #allocation15 [shape = 's32[1]{0}', space=sflag, size = 0x4, scoped, tag = 'scoped memory for dueling_dqn_forward.1']
    #allocation16 [shape = 'u8[4096]{0}', space=vmem, size = 0x1000, scoped, tag = 'output window, operand 0, single buffered']
    %18 = vsyncpa [#allocation3], 0
    %19 = vsyncpa [#allocation6], 0
    %20 = vsyncpa [#allocation9], 0
    %21 = vsyncpa [#allocation12], 0
    %22 = vsyncpa [#allocation15], 0
    %23 = vsyncpa [#allocation4], 0
    // Predicated region
    $region2: #{dueling_dqn_forward.1} parent=1 // pred_check
      _
    $region3: #{dueling_dqn_forward.1} parent=1 // pred_check_branch
      %25 = sbr.rel (0) target = $region5
    $region4: #{dueling_dqn_forward.1} parent=1 // pred_region
      %s27 = ssub.s32 128, 128
      %28 = vsyncadd [#allocation3], %s27
      %s30 = sshll.u32 [#allocation2], 4
      %s31 = int_to_ptr.vmem [resolvable:$true] %s30
      %33 = dma.hbm_to_vmem [thread:$0]  %s0, 128, %s31, [#allocation3]
    $region5: #{dueling_dqn_forward.1} parent=1 // pred_fallthru
      _
    // Predicated region
    $region6: #{dueling_dqn_forward.1} parent=1 // pred_check
      _
    $region7: #{dueling_dqn_forward.1} parent=1 // pred_check_branch
      %35 = sbr.rel (0) target = $region9
    $region8: #{dueling_dqn_forward.1} parent=1 // pred_region
      %s37 = ssub.s32 128, 128
      %38 = vsyncadd [#allocation6], %s37
      %s40 = sshll.u32 [#allocation5], 4
      %s41 = int_to_ptr.vmem [resolvable:$true] %s40
      %43 = dma.hbm_to_vmem [thread:$0]  %s1, 128, %s41, [#allocation6]
    $region9: #{dueling_dqn_forward.1} parent=1 // pred_fallthru
      _
    // Predicated region
    $region10: #{dueling_dqn_forward.1} parent=1 // pred_check
      _
    $region11: #{dueling_dqn_forward.1} parent=1 // pred_check_branch
      %45 = sbr.rel (0) target = $region13
    $region12: #{dueling_dqn_forward.1} parent=1 // pred_region
      %s47 = ssub.s32 384, 384
      %48 = vsyncadd [#allocation6], %s47
      %s49 = sshll.u32 [#allocation7], 4
      %s50 = int_to_ptr.vmem [resolvable:$true] %s49
      %55 = dma.hbm_to_vmem [thread:$0]  %s2, 384, %s50, [#allocation6], 128, 128, 8
    $region13: #{dueling_dqn_forward.1} parent=1 // pred_fallthru
      _
    // Predicated region
    $region14: #{dueling_dqn_forward.1} parent=1 // pred_check
      _
    $region15: #{dueling_dqn_forward.1} parent=1 // pred_check_branch
      %57 = sbr.rel (0) target = $region17
    $region16: #{dueling_dqn_forward.1} parent=1 // pred_region
      _
    $region17: #{dueling_dqn_forward.1} parent=1 // pred_fallthru
      _
    // Predicated region
    $region18: #{dueling_dqn_forward.1} parent=1 // pred_check
      _
    $region19: #{dueling_dqn_forward.1} parent=1 // pred_check_branch
      %59 = sbr.rel (0) target = $region21
    $region20: #{dueling_dqn_forward.1} parent=1 // pred_region
      _
    $region21: #{dueling_dqn_forward.1} parent=1 // pred_fallthru
      _
    // Predicated region
    $region22: #{dueling_dqn_forward.1} parent=1 // pred_check
      _
    $region23: #{dueling_dqn_forward.1} parent=1 // pred_check_branch
      %61 = sbr.rel (0) target = $region25
    $region24: #{dueling_dqn_forward.1} parent=1 // pred_region
      %s63 = ssub.s32 4096, 4096
      %64 = vsyncadd [#allocation9], %s63
      %s65 = sshll.u32 [#allocation8], 4
      %s66 = int_to_ptr.vmem [resolvable:$true] %s65
      %71 = dma.hbm_to_vmem [thread:$0]  %s5, 4096, %s66, [#allocation9], 128, 128, 8
    $region25: #{dueling_dqn_forward.1} parent=1 // pred_fallthru
      _
    // Predicated region
    $region26: #{dueling_dqn_forward.1} parent=1 // pred_check
      _
    $region27: #{dueling_dqn_forward.1} parent=1 // pred_check_branch
      %73 = sbr.rel (0) target = $region29
    $region28: #{dueling_dqn_forward.1} parent=1 // pred_region
      _
    $region29: #{dueling_dqn_forward.1} parent=1 // pred_fallthru
      _
    // Predicated region
    $region30: #{dueling_dqn_forward.1} parent=1 // pred_check
      _
    $region31: #{dueling_dqn_forward.1} parent=1 // pred_check_branch
      %75 = sbr.rel (0) target = $region33
    $region32: #{dueling_dqn_forward.1} parent=1 // pred_region
      %s77 = ssub.s32 2048, 2048
      %78 = vsyncadd [#allocation9], %s77
      %s79 = sshll.u32 [#allocation10], 4
      %s80 = int_to_ptr.vmem [resolvable:$true] %s79
      %85 = dma.hbm_to_vmem [thread:$0]  %s7, 2048, %s80, [#allocation9], 64, 64, 4
    $region33: #{dueling_dqn_forward.1} parent=1 // pred_fallthru
      _
    // Predicated region
    $region34: #{dueling_dqn_forward.1} parent=1 // pred_check
      _
    $region35: #{dueling_dqn_forward.1} parent=1 // pred_check_branch
      %87 = sbr.rel (0) target = $region37
    $region36: #{dueling_dqn_forward.1} parent=1 // pred_region
      _
    $region37: #{dueling_dqn_forward.1} parent=1 // pred_fallthru
      _
    // Predicated region
    $region38: #{dueling_dqn_forward.1} parent=1 // pred_check
      _
    $region39: #{dueling_dqn_forward.1} parent=1 // pred_check_branch
      %89 = sbr.rel (0) target = $region41
    $region40: #{dueling_dqn_forward.1} parent=1 // pred_region
      %s91 = ssub.s32 1024, 1024
      %92 = vsyncadd [#allocation12], %s91
      %s93 = sshll.u32 [#allocation11], 4
      %s94 = int_to_ptr.vmem [resolvable:$true] %s93
      %99 = dma.hbm_to_vmem [thread:$0]  %s9, 1024, %s94, [#allocation12], 64, 64, 4
    $region41: #{dueling_dqn_forward.1} parent=1 // pred_fallthru
      _
    // Predicated region
    $region42: #{dueling_dqn_forward.1} parent=1 // pred_check
      _
    $region43: #{dueling_dqn_forward.1} parent=1 // pred_check_branch
      %101 = sbr.rel (0) target = $region45
    $region44: #{dueling_dqn_forward.1} parent=1 // pred_region
      _
    $region45: #{dueling_dqn_forward.1} parent=1 // pred_fallthru
      _
    // Predicated region
    $region46: #{dueling_dqn_forward.1} parent=1 // pred_check
      _
    $region47: #{dueling_dqn_forward.1} parent=1 // pred_check_branch
      %103 = sbr.rel (0) target = $region49
    $region48: #{dueling_dqn_forward.1} parent=1 // pred_region
      %s105 = ssub.s32 1024, 1024
      %106 = vsyncadd [#allocation12], %s105
      %s107 = sshll.u32 [#allocation13], 4
      %s108 = int_to_ptr.vmem [resolvable:$true] %s107
      %113 = dma.hbm_to_vmem [thread:$0]  %s11, 1024, %s108, [#allocation12], 64, 64, 4
    $region49: #{dueling_dqn_forward.1} parent=1 // pred_fallthru
      _
    // Predicated region
    $region50: #{dueling_dqn_forward.1} parent=1 // pred_check
      _
    $region51: #{dueling_dqn_forward.1} parent=1 // pred_check_branch
      %115 = sbr.rel (0) target = $region53
    $region52: #{dueling_dqn_forward.1} parent=1 // pred_region
      %s117 = ssub.s32 16, 16
      %118 = vsyncadd [#allocation15], %s117
      %s120 = sshll.u32 [#allocation14], 4
      %s121 = int_to_ptr.vmem [resolvable:$true] %s120
      %123 = dma.hbm_to_vmem [thread:$0]  %s12, 16, %s121, [#allocation15]
    $region53: #{dueling_dqn_forward.1} parent=1 // pred_fallthru
      _
    // Predicated region
    $region54: #{dueling_dqn_forward.1} parent=1 // pred_check
      _
    $region55: #{dueling_dqn_forward.1} parent=1 // pred_check_branch
      %125 = sbr.rel (0) target = $region57
    $region56: #{dueling_dqn_forward.1} parent=1 // pred_region
      %126 = dma.done [#allocation3], 128
    $region57: #{dueling_dqn_forward.1} parent=1 // pred_fallthru
      _
    // Predicated region
    $region58: #{dueling_dqn_forward.1} parent=1 // pred_check
      _
    $region59: #{dueling_dqn_forward.1} parent=1 // pred_check_branch
      %128 = sbr.rel (0) target = $region61
    $region60: #{dueling_dqn_forward.1} parent=1 // pred_region
      %129 = dma.done [#allocation6], 128
    $region61: #{dueling_dqn_forward.1} parent=1 // pred_fallthru
      _
    // Predicated region
    $region62: #{dueling_dqn_forward.1} parent=1 // pred_check
      _
    $region63: #{dueling_dqn_forward.1} parent=1 // pred_check_branch
      %131 = sbr.rel (0) target = $region65
    $region64: #{dueling_dqn_forward.1} parent=1 // pred_region
      %132 = dma.done [#allocation6], 384
    $region65: #{dueling_dqn_forward.1} parent=1 // pred_fallthru
      _
    // Predicated region
    $region66: #{dueling_dqn_forward.1} parent=1 // pred_check
      _
    $region67: #{dueling_dqn_forward.1} parent=1 // pred_check_branch
      %134 = sbr.rel (0) target = $region69
    $region68: #{dueling_dqn_forward.1} parent=1 // pred_region
      %135 = dma.done [#allocation9], 4096
    $region69: #{dueling_dqn_forward.1} parent=1 // pred_fallthru
      _
    // Predicated region
    $region70: #{dueling_dqn_forward.1} parent=1 // pred_check
      _
    $region71: #{dueling_dqn_forward.1} parent=1 // pred_check_branch
      %137 = sbr.rel (0) target = $region73
    $region72: #{dueling_dqn_forward.1} parent=1 // pred_region
      %138 = dma.done [#allocation9], 2048
    $region73: #{dueling_dqn_forward.1} parent=1 // pred_fallthru
      _
    // Predicated region
    $region74: #{dueling_dqn_forward.1} parent=1 // pred_check
      _
    $region75: #{dueling_dqn_forward.1} parent=1 // pred_check_branch
      %140 = sbr.rel (0) target = $region77
    $region76: #{dueling_dqn_forward.1} parent=1 // pred_region
      %141 = dma.done [#allocation12], 1024
    $region77: #{dueling_dqn_forward.1} parent=1 // pred_fallthru
      _
    // Predicated region
    $region78: #{dueling_dqn_forward.1} parent=1 // pred_check
      _
    $region79: #{dueling_dqn_forward.1} parent=1 // pred_check_branch
      %143 = sbr.rel (0) target = $region81
    $region80: #{dueling_dqn_forward.1} parent=1 // pred_region
      %144 = dma.done [#allocation12], 1024
    $region81: #{dueling_dqn_forward.1} parent=1 // pred_fallthru
      _
    // Predicated region
    $region82: #{dueling_dqn_forward.1} parent=1 // pred_check
      _
    $region83: #{dueling_dqn_forward.1} parent=1 // pred_check_branch
      %146 = sbr.rel (0) target = $region85
    $region84: #{dueling_dqn_forward.1} parent=1 // pred_region
      %147 = dma.done [#allocation15], 16
    $region85: #{dueling_dqn_forward.1} parent=1 // pred_fallthru
      _
    %v149 = vld [vmem:[#allocation2] sm:$0xff]
    %v150 = vpack.c.bf16 %v149, %v149
    %v151 = vld [vmem:[#allocation5] sm:$0xff]
    %v152 = vpack.c.bf16 %v151, %v151
    %v153 = vld [vmem:[#allocation7] sm:$0xff]
    %v154 = vld [vmem:[#allocation7 + $0x8] sm:$0xff]
    %v155 = vld [vmem:[#allocation7 + $0x10] sm:$0xff]
    %v156 = vld [vmem:[%s3] sm:$0xff]
    %v158 = vunpack.c.l.b16 %v156
    %v159 = vunpack.c.h.b16 %v156
    %v160 = vpack.c.b16 %v158, %v158
    %v161 = vpack.c.b16 %v159, %v159
    %vm162 = vcmask 64512
    %v164 = vsel %vm162, %v152, 0
    %vm166 = vcmask 1043456
    %v168 = vsel %vm166, %v160, 0
    %v171 = vsel %vm166, %v161, 0
    %173 = vmatprep.subr.bf16.mxu0 0
    %174 = vmatpush1.bf16.msra.mxu0 0
    %175 = vmatprep.subr.bf16.mxu0 0
    %176 = vmatpush1.bf16.msra.mxu0 0
    %177 = vmatprep.subr.bf16.mxu0 0
    %178 = vmatpush1.bf16.msra.mxu0 0
    %179 = vmatprep.subr.bf16.mxu0 0
    %180 = vmatpush1.bf16.msra.mxu0 0
    %181 = vmatprep.subr.bf16.mxu0 0
    %182 = vmatpush1.bf16.msra.mxu0 0
    %183 = vmatprep.subr.bf16.mxu0 0
    %184 = vmatpush1.bf16.msra.mxu0 0
    %185 = vmatprep.subr.bf16.mxu0 0
    %186 = vmatpush1.bf16.msra.mxu0 0
    %187 = vmatprep.subr.bf16.mxu0 %v171
    %188 = vmatpush1.bf16.msra.mxu0 %v168
    %189 = vmatprep.subr.bf16.mxu0 0
    %190 = vmatpush2.bf16.msra.mxu0 0
    %191 = vmatprep.subr.bf16.mxu0 0
    %192 = vmatpush2.bf16.msra.mxu0 0
    %193 = vmatprep.subr.bf16.mxu0 0
    %194 = vmatpush2.bf16.msra.mxu0 0
    %195 = vmatprep.subr.bf16.mxu0 0
    %196 = vmatpush2.bf16.msra.mxu0 0
    %197 = vmatprep.subr.bf16.mxu0 0
    %198 = vmatpush2.bf16.msra.mxu0 0
    %199 = vmatprep.subr.bf16.mxu0 0
    %200 = vmatpush2.bf16.msra.mxu0 0
    %201 = vmatprep.subr.bf16.mxu0 0
    %202 = vmatpush2.bf16.msra.mxu0 0
    %203 = vmatprep.subr.bf16.mxu0 0
    %204 = vmatpush2.bf16.msra.mxu0 0
    %205 = vmatprep.mubr.bf16.mxu0 0
    %206 = vmatmul.mubr.bf16.gmra.mxu0 %v164
    %v207 = vpop.f32.mrf.mxu0
    %v208 = vadd.f32 0.0, %v207
    %v209 = vpop.f32.mrf.mxu0
    %v210 = vadd.f32 0.0, %v209
    %v211 = vpop.f32.mrf.mxu0
    %v212 = vpop.f32.mrf.mxu0
    %213 = vdwg.mxu0
    %v217 = vunpack.c.l.b16 %v153
    %v218 = vunpack.c.h.b16 %v153
    %v219 = vunpack.c.l.b16 %v154
    %v220 = vunpack.c.h.b16 %v154
    %v221 = vunpack.c.l.b16 %v155
    %v222 = vunpack.c.h.b16 %v155
    %v223 = vpack.c.b16 %v219, %v217
    %v224 = vpack.c.b16 %v220, %v218
    %v225 = vpack.c.b16 %v221, %v221
    %v226 = vpack.c.b16 %v222, %v222
    %vm229 = vcmask 195584
    %v231 = vsel %vm229, %v150, 0
    %v234 = vsel %vm166, %v225, 0
    %v237 = vsel %vm166, %v226, 0
    %239 = vmatprep.subr.bf16.mxu0 0
    %240 = vmatpush1.bf16.msra.mxu0 0
    %241 = vmatprep.subr.bf16.mxu0 0
    %242 = vmatpush1.bf16.msra.mxu0 0
    %243 = vmatprep.subr.bf16.mxu0 0
    %244 = vmatpush1.bf16.msra.mxu0 0
    %245 = vmatprep.subr.bf16.mxu0 0
    %246 = vmatpush1.bf16.msra.mxu0 0
    %247 = vmatprep.subr.bf16.mxu0 0
    %248 = vmatpush1.bf16.msra.mxu0 0
    %249 = vmatprep.subr.bf16.mxu0 0
    %250 = vmatpush1.bf16.msra.mxu0 0
    %251 = vmatprep.subr.bf16.mxu0 %v237
    %252 = vmatpush1.bf16.msra.mxu0 %v234
    %253 = vmatprep.subr.bf16.mxu0 %v224
    %254 = vmatpush1.bf16.msra.mxu0 %v223
    %255 = vmatprep.subr.bf16.mxu0 0
    %256 = vmatpush2.bf16.msra.mxu0 0
    %257 = vmatprep.subr.bf16.mxu0 0
    %258 = vmatpush2.bf16.msra.mxu0 0
    %259 = vmatprep.subr.bf16.mxu0 0
    %260 = vmatpush2.bf16.msra.mxu0 0
    %261 = vmatprep.subr.bf16.mxu0 0
    %262 = vmatpush2.bf16.msra.mxu0 0
    %263 = vmatprep.subr.bf16.mxu0 0
    %264 = vmatpush2.bf16.msra.mxu0 0
    %265 = vmatprep.subr.bf16.mxu0 0
    %266 = vmatpush2.bf16.msra.mxu0 0
    %267 = vmatprep.subr.bf16.mxu0 0
    %268 = vmatpush2.bf16.msra.mxu0 0
    %269 = vmatprep.subr.bf16.mxu0 0
    %270 = vmatpush2.bf16.msra.mxu0 0
    %271 = vmatprep.mubr.bf16.mxu0 0
    %272 = vmatmul.mubr.bf16.gmra.mxu0 %v231
    %v273 = vpop.f32.mrf.mxu0
    %v274 = vadd.f32 %v208, %v273
    %v275 = vpop.f32.mrf.mxu0
    %v276 = vadd.f32 %v210, %v275
    %v277 = vpop.f32.mrf.mxu0
    %v278 = vpop.f32.mrf.mxu0
    %279 = vdwg.mxu0
    %v280 = vld [vmem:[%s4] sm:$0x3]
    %v282 = vlaneseq
    %v283 = vshrl.u32 %v282, 7
    %v284 = vsub.s32 0, %v283
    %v285 = vrot.slane %v280, %v284
    %v286 = vlaneseq
    %v287 = vshrl.u32 %v286, 7
    %v288 = vsub.s32 1, %v287
    %v289 = vrot.slane %v280, %v288
    %v292 = vadd.f32 %v274, %v285
    %v293 = vadd.f32 %v276, %v289
    %v294 = vsub.f32 0.0, %v292
    %v295 = vsub.f32 0.0, %v293
    %v296 = vmul.f32 %v294, 1.442695
    %v297 = vpow.pop %v296
    %v298 = vmul.f32 %v295, 1.442695
    %v299 = vpow.pop %v298
    %v300 = vadd.f32 %v297, 1.0
    %v301 = vadd.f32 %v299, 1.0
    %v302 = vrcp.pop %v300
    %v303 = vrcp.pop %v301
    %v304 = vmul.f32 %v292, %v302
    %v305 = vmul.f32 %v293, %v303
    %v306 = vpack.c.bf16 %v304, %v304
    %v307 = vpack.c.bf16 %v305, %v305
    %v308 = vld [vmem:[#allocation8] sm:$0xff]
    %v309 = vld [vmem:[#allocation8 + $0x8] sm:$0xff]
    %v310 = vld [vmem:[#allocation8 + $0x10] sm:$0xff]
    %v311 = vld [vmem:[#allocation8 + $0x18] sm:$0xff]
    %v312 = vld [vmem:[#allocation8 + $0x20] sm:$0xff]
    %v313 = vld [vmem:[#allocation8 + $0x28] sm:$0xff]
    %v314 = vld [vmem:[#allocation8 + $0x30] sm:$0xff]
    %v315 = vld [vmem:[#allocation8 + $0x38] sm:$0xff]
    %v316 = vld [vmem:[#allocation8 + $0x40] sm:$0xff]
    %v317 = vld [vmem:[#allocation8 + $0x48] sm:$0xff]
    %v318 = vld [vmem:[#allocation8 + $0x50] sm:$0xff]
    %v319 = vld [vmem:[#allocation8 + $0x58] sm:$0xff]
    %v320 = vld [vmem:[#allocation8 + $0x60] sm:$0xff]
    %v321 = vld [vmem:[#allocation8 + $0x68] sm:$0xff]
    %v322 = vld [vmem:[#allocation8 + $0x70] sm:$0xff]
    %v323 = vld [vmem:[#allocation8 + $0x78] sm:$0xff]
    %v324 = vld [vmem:[#allocation8 + $0x80] sm:$0xff]
    %v325 = vld [vmem:[#allocation8 + $0x88] sm:$0xff]
    %v326 = vld [vmem:[#allocation8 + $0x90] sm:$0xff]
    %v327 = vld [vmem:[#allocation8 + $0x98] sm:$0xff]
    %v328 = vld [vmem:[#allocation8 + $0xa0] sm:$0xff]
    %v329 = vld [vmem:[#allocation8 + $0xa8] sm:$0xff]
    %v330 = vld [vmem:[#allocation8 + $0xb0] sm:$0xff]
    %v331 = vld [vmem:[#allocation8 + $0xb8] sm:$0xff]
    %v332 = vld [vmem:[#allocation8 + $0xc0] sm:$0xff]
    %v333 = vld [vmem:[#allocation8 + $0xc8] sm:$0xff]
    %v334 = vld [vmem:[#allocation8 + $0xd0] sm:$0xff]
    %v335 = vld [vmem:[#allocation8 + $0xd8] sm:$0xff]
    %v336 = vld [vmem:[#allocation8 + $0xe0] sm:$0xff]
    %v337 = vld [vmem:[#allocation8 + $0xe8] sm:$0xff]
    %v338 = vld [vmem:[#allocation8 + $0xf0] sm:$0xff]
    %v339 = vld [vmem:[#allocation8 + $0xf8] sm:$0xff]
    %v340 = vld [vmem:[%s6] sm:$0x3]
    %v342 = vlaneseq
    %v343 = vshrl.u32 %v342, 7
    %v344 = vsub.s32 0, %v343
    %v345 = vrot.slane %v340, %v344
    %v346 = vlaneseq
    %v347 = vshrl.u32 %v346, 7
    %v348 = vsub.s32 1, %v347
    %v349 = vrot.slane %v340, %v348
    %v384 = vunpack.c.l.b16 %v308
    %v385 = vunpack.c.h.b16 %v308
    %v386 = vunpack.c.l.b16 %v309
    %v387 = vunpack.c.h.b16 %v309
    %v388 = vunpack.c.l.b16 %v310
    %v389 = vunpack.c.h.b16 %v310
    %v390 = vunpack.c.l.b16 %v311
    %v391 = vunpack.c.h.b16 %v311
    %v392 = vunpack.c.l.b16 %v312
    %v393 = vunpack.c.h.b16 %v312
    %v394 = vunpack.c.l.b16 %v313
    %v395 = vunpack.c.h.b16 %v313
    %v396 = vunpack.c.l.b16 %v314
    %v397 = vunpack.c.h.b16 %v314
    %v398 = vunpack.c.l.b16 %v315
    %v399 = vunpack.c.h.b16 %v315
    %v400 = vunpack.c.l.b16 %v316
    %v401 = vunpack.c.h.b16 %v316
    %v402 = vunpack.c.l.b16 %v317
    %v403 = vunpack.c.h.b16 %v317
    %v404 = vunpack.c.l.b16 %v318
    %v405 = vunpack.c.h.b16 %v318
    %v406 = vunpack.c.l.b16 %v319
    %v407 = vunpack.c.h.b16 %v319
    %v408 = vunpack.c.l.b16 %v320
    %v409 = vunpack.c.h.b16 %v320
    %v410 = vunpack.c.l.b16 %v321
    %v411 = vunpack.c.h.b16 %v321
    %v412 = vunpack.c.l.b16 %v322
    %v413 = vunpack.c.h.b16 %v322
    %v414 = vunpack.c.l.b16 %v323
    %v415 = vunpack.c.h.b16 %v323
    %v416 = vunpack.c.l.b16 %v324
    %v417 = vunpack.c.h.b16 %v324
    %v418 = vunpack.c.l.b16 %v325
    %v419 = vunpack.c.h.b16 %v325
    %v420 = vunpack.c.l.b16 %v326
    %v421 = vunpack.c.h.b16 %v326
    %v422 = vunpack.c.l.b16 %v327
    %v423 = vunpack.c.h.b16 %v327
    %v424 = vunpack.c.l.b16 %v328
    %v425 = vunpack.c.h.b16 %v328
    %v426 = vunpack.c.l.b16 %v329
    %v427 = vunpack.c.h.b16 %v329
    %v428 = vunpack.c.l.b16 %v330
    %v429 = vunpack.c.h.b16 %v330
    %v430 = vunpack.c.l.b16 %v331
    %v431 = vunpack.c.h.b16 %v331
    %v432 = vunpack.c.l.b16 %v332
    %v433 = vunpack.c.h.b16 %v332
    %v434 = vunpack.c.l.b16 %v333
    %v435 = vunpack.c.h.b16 %v333
    %v436 = vunpack.c.l.b16 %v334
    %v437 = vunpack.c.h.b16 %v334
    %v438 = vunpack.c.l.b16 %v335
    %v439 = vunpack.c.h.b16 %v335
    %v440 = vunpack.c.l.b16 %v336
    %v441 = vunpack.c.h.b16 %v336
    %v442 = vunpack.c.l.b16 %v337
    %v443 = vunpack.c.h.b16 %v337
    %v444 = vunpack.c.l.b16 %v338
    %v445 = vunpack.c.h.b16 %v338
    %v446 = vunpack.c.l.b16 %v339
    %v447 = vunpack.c.h.b16 %v339
    %v448 = vpack.c.b16 %v386, %v384
    %v449 = vpack.c.b16 %v387, %v385
    %v450 = vpack.c.b16 %v390, %v388
    %v451 = vpack.c.b16 %v391, %v389
    %v452 = vpack.c.b16 %v394, %v392
    %v453 = vpack.c.b16 %v395, %v393
    %v454 = vpack.c.b16 %v398, %v396
    %v455 = vpack.c.b16 %v399, %v397
    %v456 = vpack.c.b16 %v402, %v400
    %v457 = vpack.c.b16 %v403, %v401
    %v458 = vpack.c.b16 %v406, %v404
    %v459 = vpack.c.b16 %v407, %v405
    %v460 = vpack.c.b16 %v410, %v408
    %v461 = vpack.c.b16 %v411, %v409
    %v462 = vpack.c.b16 %v414, %v412
    %v463 = vpack.c.b16 %v415, %v413
    %v464 = vpack.c.b16 %v418, %v416
    %v465 = vpack.c.b16 %v419, %v417
    %v466 = vpack.c.b16 %v422, %v420
    %v467 = vpack.c.b16 %v423, %v421
    %v468 = vpack.c.b16 %v426, %v424
    %v469 = vpack.c.b16 %v427, %v425
    %v470 = vpack.c.b16 %v430, %v428
    %v471 = vpack.c.b16 %v431, %v429
    %v472 = vpack.c.b16 %v434, %v432
    %v473 = vpack.c.b16 %v435, %v433
    %v474 = vpack.c.b16 %v438, %v436
    %v475 = vpack.c.b16 %v439, %v437
    %v476 = vpack.c.b16 %v442, %v440
    %v477 = vpack.c.b16 %v443, %v441
    %v478 = vpack.c.b16 %v446, %v444
    %v479 = vpack.c.b16 %v447, %v445
    %512 = vmatprep.subr.bf16.mxu0 %v463
    %513 = vmatpush1.bf16.msra.mxu0 %v462
    %514 = vmatprep.subr.bf16.mxu0 %v461
    %515 = vmatpush1.bf16.msra.mxu0 %v460
    %516 = vmatprep.subr.bf16.mxu0 %v459
    %517 = vmatpush1.bf16.msra.mxu0 %v458
    %518 = vmatprep.subr.bf16.mxu0 %v457
    %519 = vmatpush1.bf16.msra.mxu0 %v456
    %520 = vmatprep.subr.bf16.mxu0 %v455
    %521 = vmatpush1.bf16.msra.mxu0 %v454
    %522 = vmatprep.subr.bf16.mxu0 %v453
    %523 = vmatpush1.bf16.msra.mxu0 %v452
    %524 = vmatprep.subr.bf16.mxu0 %v451
    %525 = vmatpush1.bf16.msra.mxu0 %v450
    %526 = vmatprep.subr.bf16.mxu0 %v449
    %527 = vmatpush1.bf16.msra.mxu0 %v448
    %528 = vmatprep.subr.bf16.mxu0 %v479
    %529 = vmatpush2.bf16.msra.mxu0 %v478
    %530 = vmatprep.subr.bf16.mxu0 %v477
    %531 = vmatpush2.bf16.msra.mxu0 %v476
    %532 = vmatprep.subr.bf16.mxu0 %v475
    %533 = vmatpush2.bf16.msra.mxu0 %v474
    %534 = vmatprep.subr.bf16.mxu0 %v473
    %535 = vmatpush2.bf16.msra.mxu0 %v472
    %536 = vmatprep.subr.bf16.mxu0 %v471
    %537 = vmatpush2.bf16.msra.mxu0 %v470
    %538 = vmatprep.subr.bf16.mxu0 %v469
    %539 = vmatpush2.bf16.msra.mxu0 %v468
    %540 = vmatprep.subr.bf16.mxu0 %v467
    %541 = vmatpush2.bf16.msra.mxu0 %v466
    %542 = vmatprep.subr.bf16.mxu0 %v465
    %543 = vmatpush2.bf16.msra.mxu0 %v464
    %544 = vmatprep.mubr.bf16.mxu0 %v307
    %545 = vmatmul.mubr.bf16.gmra.mxu0 %v306
    %v546 = vpop.f32.mrf.mxu0
    %v547 = vadd.f32 %v345, %v546
    %v548 = vpop.f32.mrf.mxu0
    %v549 = vadd.f32 %v349, %v548
    %v550 = vpop.f32.mrf.mxu0
    %v551 = vpop.f32.mrf.mxu0
    %552 = vdwg.mxu0
    %v553 = vsub.f32 0.0, %v547
    %v554 = vsub.f32 0.0, %v549
    %v555 = vmul.f32 %v553, 1.442695
    %v556 = vpow.pop %v555
    %v557 = vmul.f32 %v554, 1.442695
    %v558 = vpow.pop %v557
    %v559 = vadd.f32 %v556, 1.0
    %v560 = vadd.f32 %v558, 1.0
    %v561 = vrcp.pop %v559
    %v562 = vrcp.pop %v560
    %v563 = vmul.f32 %v547, %v561
    %v564 = vmul.f32 %v549, %v562
    %v565 = vpack.c.bf16 %v563, %v563
    %v566 = vpack.c.bf16 %v564, %v564
    %v567 = vld [vmem:[#allocation10] sm:$0xf]
    %v568 = vld [vmem:[#allocation10 + $0x4] sm:$0xf]
    %v569 = vld [vmem:[#allocation10 + $0x8] sm:$0xf]
    %v570 = vld [vmem:[#allocation10 + $0xc] sm:$0xf]
    %v571 = vld [vmem:[#allocation10 + $0x10] sm:$0xf]
    %v572 = vld [vmem:[#allocation10 + $0x14] sm:$0xf]
    %v573 = vld [vmem:[#allocation10 + $0x18] sm:$0xf]
    %v574 = vld [vmem:[#allocation10 + $0x1c] sm:$0xf]
    %v575 = vld [vmem:[#allocation10 + $0x20] sm:$0xf]
    %v576 = vld [vmem:[#allocation10 + $0x24] sm:$0xf]
    %v577 = vld [vmem:[#allocation10 + $0x28] sm:$0xf]
    %v578 = vld [vmem:[#allocation10 + $0x2c] sm:$0xf]
    %v579 = vld [vmem:[#allocation10 + $0x30] sm:$0xf]
    %v580 = vld [vmem:[#allocation10 + $0x34] sm:$0xf]
    %v581 = vld [vmem:[#allocation10 + $0x38] sm:$0xf]
    %v582 = vld [vmem:[#allocation10 + $0x3c] sm:$0xf]
    %v583 = vld [vmem:[#allocation10 + $0x40] sm:$0xf]
    %v584 = vld [vmem:[#allocation10 + $0x44] sm:$0xf]
    %v585 = vld [vmem:[#allocation10 + $0x48] sm:$0xf]
    %v586 = vld [vmem:[#allocation10 + $0x4c] sm:$0xf]
    %v587 = vld [vmem:[#allocation10 + $0x50] sm:$0xf]
    %v588 = vld [vmem:[#allocation10 + $0x54] sm:$0xf]
    %v589 = vld [vmem:[#allocation10 + $0x58] sm:$0xf]
    %v590 = vld [vmem:[#allocation10 + $0x5c] sm:$0xf]
    %v591 = vld [vmem:[#allocation10 + $0x60] sm:$0xf]
    %v592 = vld [vmem:[#allocation10 + $0x64] sm:$0xf]
    %v593 = vld [vmem:[#allocation10 + $0x68] sm:$0xf]
    %v594 = vld [vmem:[#allocation10 + $0x6c] sm:$0xf]
    %v595 = vld [vmem:[#allocation10 + $0x70] sm:$0xf]
    %v596 = vld [vmem:[#allocation10 + $0x74] sm:$0xf]
    %v597 = vld [vmem:[#allocation10 + $0x78] sm:$0xf]
    %v598 = vld [vmem:[#allocation10 + $0x7c] sm:$0xf]
    %v599 = vld [vmem:[%s8] sm:$0x1]
    %v601 = vlaneseq
    %v602 = vshrl.u32 %v601, 7
    %v603 = vsub.s32 0, %v602
    %v604 = vrot.slane %v599, %v603
    %v638 = vunpack.c.l.b16 %v567
    %v639 = vunpack.c.l.b16 %v568
    %v640 = vunpack.c.l.b16 %v569
    %v641 = vunpack.c.l.b16 %v570
    %v642 = vunpack.c.l.b16 %v571
    %v643 = vunpack.c.l.b16 %v572
    %v644 = vunpack.c.l.b16 %v573
    %v645 = vunpack.c.l.b16 %v574
    %v646 = vunpack.c.l.b16 %v575
    %v647 = vunpack.c.l.b16 %v576
    %v648 = vunpack.c.l.b16 %v577
    %v649 = vunpack.c.l.b16 %v578
    %v650 = vunpack.c.l.b16 %v579
    %v651 = vunpack.c.l.b16 %v580
    %v652 = vunpack.c.l.b16 %v581
    %v653 = vunpack.c.l.b16 %v582
    %v654 = vunpack.c.l.b16 %v583
    %v655 = vunpack.c.l.b16 %v584
    %v656 = vunpack.c.l.b16 %v585
    %v657 = vunpack.c.l.b16 %v586
    %v658 = vunpack.c.l.b16 %v587
    %v659 = vunpack.c.l.b16 %v588
    %v660 = vunpack.c.l.b16 %v589
    %v661 = vunpack.c.l.b16 %v590
    %v662 = vunpack.c.l.b16 %v591
    %v663 = vunpack.c.l.b16 %v592
    %v664 = vunpack.c.l.b16 %v593
    %v665 = vunpack.c.l.b16 %v594
    %v666 = vunpack.c.l.b16 %v595
    %v667 = vunpack.c.l.b16 %v596
    %v668 = vunpack.c.l.b16 %v597
    %v669 = vunpack.c.l.b16 %v598
    %v670 = vpack.c.b16 %v639, %v638
    %v671 = vpack.c.b16 %v641, %v640
    %v672 = vpack.c.b16 %v643, %v642
    %v673 = vpack.c.b16 %v645, %v644
    %v674 = vpack.c.b16 %v647, %v646
    %v675 = vpack.c.b16 %v649, %v648
    %v676 = vpack.c.b16 %v651, %v650
    %v677 = vpack.c.b16 %v653, %v652
    %v678 = vpack.c.b16 %v655, %v654
    %v679 = vpack.c.b16 %v657, %v656
    %v680 = vpack.c.b16 %v659, %v658
    %v681 = vpack.c.b16 %v661, %v660
    %v682 = vpack.c.b16 %v663, %v662
    %v683 = vpack.c.b16 %v665, %v664
    %v684 = vpack.c.b16 %v667, %v666
    %v685 = vpack.c.b16 %v669, %v668
    %702 = vmatprep.subr.bf16.mxu0 0
    %703 = vmatpush1.bf16.msra.mxu0 %v677
    %704 = vmatprep.subr.bf16.mxu0 0
    %705 = vmatpush1.bf16.msra.mxu0 %v676
    %706 = vmatprep.subr.bf16.mxu0 0
    %707 = vmatpush1.bf16.msra.mxu0 %v675
    %708 = vmatprep.subr.bf16.mxu0 0
    %709 = vmatpush1.bf16.msra.mxu0 %v674
    %710 = vmatprep.subr.bf16.mxu0 0
    %711 = vmatpush1.bf16.msra.mxu0 %v673
    %712 = vmatprep.subr.bf16.mxu0 0
    %713 = vmatpush1.bf16.msra.mxu0 %v672
    %714 = vmatprep.subr.bf16.mxu0 0
    %715 = vmatpush1.bf16.msra.mxu0 %v671
    %716 = vmatprep.subr.bf16.mxu0 0
    %717 = vmatpush1.bf16.msra.mxu0 %v670
    %718 = vmatprep.subr.bf16.mxu0 0
    %719 = vmatpush2.bf16.msra.mxu0 %v685
    %720 = vmatprep.subr.bf16.mxu0 0
    %721 = vmatpush2.bf16.msra.mxu0 %v684
    %722 = vmatprep.subr.bf16.mxu0 0
    %723 = vmatpush2.bf16.msra.mxu0 %v683
    %724 = vmatprep.subr.bf16.mxu0 0
    %725 = vmatpush2.bf16.msra.mxu0 %v682
    %726 = vmatprep.subr.bf16.mxu0 0
    %727 = vmatpush2.bf16.msra.mxu0 %v681
    %728 = vmatprep.subr.bf16.mxu0 0
    %729 = vmatpush2.bf16.msra.mxu0 %v680
    %730 = vmatprep.subr.bf16.mxu0 0
    %731 = vmatpush2.bf16.msra.mxu0 %v679
    %732 = vmatprep.subr.bf16.mxu0 0
    %733 = vmatpush2.bf16.msra.mxu0 %v678
    %734 = vmatprep.mubr.bf16.mxu0 %v566
    %735 = vmatmul.mubr.bf16.gmra.mxu0 %v565
    %v736 = vpop.f32.mrf.mxu0
    %v737 = vadd.f32 %v604, %v736
    %v738 = vpop.f32.mrf.mxu0
    %v739 = vpop.f32.mrf.mxu0
    %v740 = vpop.f32.mrf.mxu0
    %741 = vdwg.mxu0
    %v742 = vsub.f32 0.0, %v737
    %v743 = vmul.f32 %v742, 1.442695
    %v744 = vpow.pop %v743
    %v745 = vadd.f32 %v744, 1.0
    %v746 = vrcp.pop %v745
    %v747 = vmul.f32 %v737, %v746
    %v748 = vpack.c.bf16 %v747, %v747
    %v749 = vld [vmem:[#allocation11] sm:$0xf]
    %v750 = vld [vmem:[#allocation11 + $0x4] sm:$0xf]
    %v751 = vld [vmem:[#allocation11 + $0x8] sm:$0xf]
    %v752 = vld [vmem:[#allocation11 + $0xc] sm:$0xf]
    %v753 = vld [vmem:[#allocation11 + $0x10] sm:$0xf]
    %v754 = vld [vmem:[#allocation11 + $0x14] sm:$0xf]
    %v755 = vld [vmem:[#allocation11 + $0x18] sm:$0xf]
    %v756 = vld [vmem:[#allocation11 + $0x1c] sm:$0xf]
    %v757 = vld [vmem:[#allocation11 + $0x20] sm:$0xf]
    %v758 = vld [vmem:[#allocation11 + $0x24] sm:$0xf]
    %v759 = vld [vmem:[#allocation11 + $0x28] sm:$0xf]
    %v760 = vld [vmem:[#allocation11 + $0x2c] sm:$0xf]
    %v761 = vld [vmem:[#allocation11 + $0x30] sm:$0xf]
    %v762 = vld [vmem:[#allocation11 + $0x34] sm:$0xf]
    %v763 = vld [vmem:[#allocation11 + $0x38] sm:$0xf]
    %v764 = vld [vmem:[#allocation11 + $0x3c] sm:$0xf]
    %v765 = vld [vmem:[%s10] sm:$0x1]
    %v767 = vlaneseq
    %v768 = vshrl.u32 %v767, 7
    %v769 = vsub.s32 0, %v768
    %v770 = vrot.slane %v765, %v769
    %v788 = vunpack.c.l.b16 %v749
    %v789 = vunpack.c.l.b16 %v750
    %v790 = vunpack.c.l.b16 %v751
    %v791 = vunpack.c.l.b16 %v752
    %v792 = vunpack.c.l.b16 %v753
    %v793 = vunpack.c.l.b16 %v754
    %v794 = vunpack.c.l.b16 %v755
    %v795 = vunpack.c.l.b16 %v756
    %v796 = vunpack.c.l.b16 %v757
    %v797 = vunpack.c.l.b16 %v758
    %v798 = vunpack.c.l.b16 %v759
    %v799 = vunpack.c.l.b16 %v760
    %v800 = vunpack.c.l.b16 %v761
    %v801 = vunpack.c.l.b16 %v762
    %v802 = vunpack.c.l.b16 %v763
    %v803 = vunpack.c.l.b16 %v764
    %v804 = vpack.c.b16 %v789, %v788
    %v805 = vpack.c.b16 %v791, %v790
    %v806 = vpack.c.b16 %v793, %v792
    %v807 = vpack.c.b16 %v795, %v794
    %v808 = vpack.c.b16 %v797, %v796
    %v809 = vpack.c.b16 %v799, %v798
    %v810 = vpack.c.b16 %v801, %v800
    %v811 = vpack.c.b16 %v803, %v802
    %820 = vmatprep.subr.bf16.mxu0 0
    %821 = vmatpush1.bf16.msra.mxu0 %v811
    %822 = vmatprep.subr.bf16.mxu0 0
    %823 = vmatpush1.bf16.msra.mxu0 %v810
    %824 = vmatprep.subr.bf16.mxu0 0
    %825 = vmatpush1.bf16.msra.mxu0 %v809
    %826 = vmatprep.subr.bf16.mxu0 0
    %827 = vmatpush1.bf16.msra.mxu0 %v808
    %828 = vmatprep.subr.bf16.mxu0 0
    %829 = vmatpush1.bf16.msra.mxu0 %v807
    %830 = vmatprep.subr.bf16.mxu0 0
    %831 = vmatpush1.bf16.msra.mxu0 %v806
    %832 = vmatprep.subr.bf16.mxu0 0
    %833 = vmatpush1.bf16.msra.mxu0 %v805
    %834 = vmatprep.subr.bf16.mxu0 0
    %835 = vmatpush1.bf16.msra.mxu0 %v804
    %836 = vmatprep.subr.bf16.mxu0 0
    %837 = vmatpush2.bf16.msra.mxu0 0
    %838 = vmatprep.subr.bf16.mxu0 0
    %839 = vmatpush2.bf16.msra.mxu0 0
    %840 = vmatprep.subr.bf16.mxu0 0
    %841 = vmatpush2.bf16.msra.mxu0 0
    %842 = vmatprep.subr.bf16.mxu0 0
    %843 = vmatpush2.bf16.msra.mxu0 0
    %844 = vmatprep.subr.bf16.mxu0 0
    %845 = vmatpush2.bf16.msra.mxu0 0
    %846 = vmatprep.subr.bf16.mxu0 0
    %847 = vmatpush2.bf16.msra.mxu0 0
    %848 = vmatprep.subr.bf16.mxu0 0
    %849 = vmatpush2.bf16.msra.mxu0 0
    %850 = vmatprep.subr.bf16.mxu0 0
    %851 = vmatpush2.bf16.msra.mxu0 0
    %852 = vmatprep.mubr.bf16.mxu0 0
    %853 = vmatmul.mubr.bf16.gmra.mxu0 %v748
    %v854 = vpop.f32.mrf.mxu0
    %v855 = vadd.f32 %v770, %v854
    %v856 = vpop.f32.mrf.mxu0
    %v857 = vpop.f32.mrf.mxu0
    %v858 = vpop.f32.mrf.mxu0
    %859 = vdwg.mxu0
    %v860 = vsub.f32 0.0, %v855
    %v861 = vmul.f32 %v860, 1.442695
    %v862 = vpow.pop %v861
    %v863 = vadd.f32 %v862, 1.0
    %v864 = vrcp.pop %v863
    %v865 = vmul.f32 %v855, %v864
    %v866 = vpack.c.bf16 %v865, %v865
    %v867 = vld [vmem:[#allocation13] sm:$0xf]
    %v868 = vld [vmem:[#allocation13 + $0x4] sm:$0xf]
    %v869 = vld [vmem:[#allocation13 + $0x8] sm:$0xf]
    %v870 = vld [vmem:[#allocation13 + $0xc] sm:$0xf]
    %v871 = vld [vmem:[#allocation13 + $0x10] sm:$0xf]
    %v872 = vld [vmem:[#allocation13 + $0x14] sm:$0xf]
    %v873 = vld [vmem:[#allocation13 + $0x18] sm:$0xf]
    %v874 = vld [vmem:[#allocation13 + $0x1c] sm:$0xf]
    %v875 = vld [vmem:[#allocation13 + $0x20] sm:$0xf]
    %v876 = vld [vmem:[#allocation13 + $0x24] sm:$0xf]
    %v877 = vld [vmem:[#allocation13 + $0x28] sm:$0xf]
    %v878 = vld [vmem:[#allocation13 + $0x2c] sm:$0xf]
    %v879 = vld [vmem:[#allocation13 + $0x30] sm:$0xf]
    %v880 = vld [vmem:[#allocation13 + $0x34] sm:$0xf]
    %v881 = vld [vmem:[#allocation13 + $0x38] sm:$0xf]
    %v882 = vld [vmem:[#allocation13 + $0x3c] sm:$0xf]
    %v883 = vld [vmem:[#allocation14] sm:$0x1]
    %v885 = vlaneseq
    %v886 = vshrl.u32 %v885, 7
    %v887 = vsub.s32 0, %v886
    %v888 = vrot.slane %v883, %v887
    %v906 = vunpack.c.l.b16 %v867
    %v907 = vunpack.c.l.b16 %v868
    %v908 = vunpack.c.l.b16 %v869
    %v909 = vunpack.c.l.b16 %v870
    %v910 = vunpack.c.l.b16 %v871
    %v911 = vunpack.c.l.b16 %v872
    %v912 = vunpack.c.l.b16 %v873
    %v913 = vunpack.c.l.b16 %v874
    %v914 = vunpack.c.l.b16 %v875
    %v915 = vunpack.c.l.b16 %v876
    %v916 = vunpack.c.l.b16 %v877
    %v917 = vunpack.c.l.b16 %v878
    %v918 = vunpack.c.l.b16 %v879
    %v919 = vunpack.c.l.b16 %v880
    %v920 = vunpack.c.l.b16 %v881
    %v921 = vunpack.c.l.b16 %v882
    %v922 = vpack.c.b16 %v907, %v906
    %v923 = vpack.c.b16 %v909, %v908
    %v924 = vpack.c.b16 %v911, %v910
    %v925 = vpack.c.b16 %v913, %v912
    %v926 = vpack.c.b16 %v915, %v914
    %v927 = vpack.c.b16 %v917, %v916
    %v928 = vpack.c.b16 %v919, %v918
    %v929 = vpack.c.b16 %v921, %v920
    %938 = vmatprep.subr.bf16.mxu0 0
    %939 = vmatpush1.bf16.msra.mxu0 %v929
    %940 = vmatprep.subr.bf16.mxu0 0
    %941 = vmatpush1.bf16.msra.mxu0 %v928
    %942 = vmatprep.subr.bf16.mxu0 0
    %943 = vmatpush1.bf16.msra.mxu0 %v927
    %944 = vmatprep.subr.bf16.mxu0 0
    %945 = vmatpush1.bf16.msra.mxu0 %v926
    %946 = vmatprep.subr.bf16.mxu0 0
    %947 = vmatpush1.bf16.msra.mxu0 %v925
    %948 = vmatprep.subr.bf16.mxu0 0
    %949 = vmatpush1.bf16.msra.mxu0 %v924
    %950 = vmatprep.subr.bf16.mxu0 0
    %951 = vmatpush1.bf16.msra.mxu0 %v923
    %952 = vmatprep.subr.bf16.mxu0 0
    %953 = vmatpush1.bf16.msra.mxu0 %v922
    %954 = vmatprep.subr.bf16.mxu0 0
    %955 = vmatpush2.bf16.msra.mxu0 0
    %956 = vmatprep.subr.bf16.mxu0 0
    %957 = vmatpush2.bf16.msra.mxu0 0
    %958 = vmatprep.subr.bf16.mxu0 0
    %959 = vmatpush2.bf16.msra.mxu0 0
    %960 = vmatprep.subr.bf16.mxu0 0
    %961 = vmatpush2.bf16.msra.mxu0 0
    %962 = vmatprep.subr.bf16.mxu0 0
    %963 = vmatpush2.bf16.msra.mxu0 0
    %964 = vmatprep.subr.bf16.mxu0 0
    %965 = vmatpush2.bf16.msra.mxu0 0
    %966 = vmatprep.subr.bf16.mxu0 0
    %967 = vmatpush2.bf16.msra.mxu0 0
    %968 = vmatprep.subr.bf16.mxu0 0
    %969 = vmatpush2.bf16.msra.mxu0 0
    %970 = vmatprep.mubr.bf16.mxu0 0
    %971 = vmatmul.mubr.bf16.gmra.mxu0 %v866
    %v972 = vpop.f32.mrf.mxu0
    %v973 = vadd.f32 %v888, %v972
    %v974 = vpop.f32.mrf.mxu0
    %v975 = vpop.f32.mrf.mxu0
    %v976 = vpop.f32.mrf.mxu0
    %977 = vdwg.mxu0
    %vm978 = vcmask 48128
    %v979 = vsel %vm978, %v973, 0.0
    %980 = vadd.xlane.f32.xlu0 %v979
    %v981 = vpop.xlane.xlu0 %980
    %v982 = vmul.f32 %v981, 0.16666667
    %v983 = vsub.f32 %v973, %v982
    %985 = vset.pattern.permute.xlu0 6
    %986 = vperm.xlu0 %985, %v983
    %v987 = vpop.permute.xlu0 %986
    %v989 = vadd.f32 %v973, %v987
    %990 = vst [vmem:[#allocation16] sm:$0xff] %v989
    // Predicated region
    $region86: #{dueling_dqn_forward.1} parent=1 // pred_check
      _
    $region87: #{dueling_dqn_forward.1} parent=1 // pred_check_branch
      %992 = sbr.rel (0) target = $region89
    $region88: #{dueling_dqn_forward.1} parent=1 // pred_region
      %s994 = ssub.s32 128, 128
      %995 = vsyncadd [#allocation4], %s994
      %s997 = sshll.u32 [#allocation16], 4
      %s998 = int_to_ptr.vmem [resolvable:$true] %s997
      %1000 = dma.vmem_to_hbm [thread:$0]  %s998, 128, %s13, [#allocation4]
    $region89: #{dueling_dqn_forward.1} parent=1 // pred_fallthru
      _
    // Predicated region
    $region90: #{dueling_dqn_forward.1} parent=1 // pred_check
      _
    $region91: #{dueling_dqn_forward.1} parent=1 // pred_check_branch
      %1002 = sbr.rel (0) target = $region93
    $region92: #{dueling_dqn_forward.1} parent=1 // pred_region
      %1003 = dma.done [#allocation4], 128
    $region93: #{dueling_dqn_forward.1} parent=1 // pred_fallthru
      _
    %1004 = vsyncpa [#allocation3], 1
    %1005 = vsyncpa [#allocation6], 1
    %1006 = vsyncpa [#allocation9], 1
    %1007 = vsyncpa [#allocation12], 1
    %1008 = vsyncpa [#allocation15], 1
    %1009 = vsyncpa [#allocation4], 1

</llo_original>
